<compile_context>
chip_gen: v7x
topology: tpu7x:2x2x1
jax: 0.10.0
libtpu: 0.0.40
codegen_flags: <defaults>
</compile_context>

<pallas_src>
import functools

import jax
import jax.numpy as jnp
from jax.experimental import pallas as pl
from jax.experimental.pallas import tpu as pltpu  # noqa: F401  (TPU backend)


def _cat_tanh_pairs_kernel(xp_ref, o_ref, *, batch: int, half: int):
    """xp_ref: (batch*half, 2) = x.reshape(-1, 2); o_ref: (2*batch*half, 2).

    Output flat order must equal flatten(cat([x, x], dim=1)):
      [x0.flat, x0.flat, x1.flat, x1.flat, ...] viewed as pairs, i.e. each
    batch's `half` pair-rows appear twice back-to-back.
    """
    t = jnp.tanh(xp_ref[...])                         # EUP tanh, f32
    slabs = []
    for i in range(batch):                            # static unroll (tiny batch)
        slab = t[i * half:(i + 1) * half, :]          # this batch's pair rows
        slabs.append(slab)
        slabs.append(slab)                            # duplicated channel copy
    o_ref[...] = jnp.concatenate(slabs, axis=0)       # single full-block store


@jax.jit
def model_forward(x: jax.Array) -> jax.Array:
    """Replicates Model.forward. x: (B, C, L) float32 -> (B*C*L, 2)."""
    b, c, l = x.shape
    cl = c * l
    assert cl % 2 == 0, "per-batch element count must be even for pair rows"
    half = cl // 2
    out_rows = 2 * b * half                           # == b * c * l

    # Leading layout-only op: group the flat order of x into (pairs, 2).
    xp = x.reshape(b * half, 2)

    kernel = functools.partial(_cat_tanh_pairs_kernel, batch=b, half=half)
    return pl.pallas_call(
        kernel,
        out_shape=jax.ShapeDtypeStruct((out_rows, 2), x.dtype),
        # Single grid point; full-array blocks (block == array dims is legal
        # even when not (8,128)-aligned). No trailing reshape needed: this IS
        # the final answer.
        in_specs=[pl.BlockSpec((b * half, 2), lambda: (0, 0))],
        out_specs=pl.BlockSpec((out_rows, 2), lambda: (0, 0)),
    )(xp)


if __name__ == "__main__":
    key = jax.random.PRNGKey(0)
    x = jax.random.normal(key, (2, 3, 4), dtype=jnp.float32)

    z = model_forward(x)
    jax.block_until_ready(z)

    # Reference check against plain JAX semantics of the PyTorch module.
    ref = jnp.tanh(jnp.concatenate([x, x], axis=1)).reshape(-1, 2)
    assert z.shape == (24, 2), z.shape
    assert jnp.allclose(z, ref, atol=1e-6), "mismatch vs reference"

    print("KERNEL_OK")
</pallas_src>

<mosaic_0001>
module attributes {stable_mosaic.version = 11 : i64} {
  func.func @_cat_tanh_pairs_kernel(%arg0: memref<12x2xf32, #tpu.memory_space<vmem>>, %arg1: memref<24x2xf32, #tpu.memory_space<vmem>>) attributes {dimension_semantics = [], scalar_prefetch = 0 : i64, scratch_operands = 0 : i64, tpu.core_type = #tpu.core_type<tc>} {
    %c0 = arith.constant 0 : index
    %c0_0 = arith.constant 0 : index
    %0 = vector.load %arg0[%c0, %c0_0] : memref<12x2xf32, #tpu.memory_space<vmem>>, vector<12x2xf32>
    %1 = math.tanh %0 : vector<12x2xf32>
    %2 = vector.extract_strided_slice %1 {offsets = [0, 0], sizes = [6, 2], strides = [1, 1]} : vector<12x2xf32> to vector<6x2xf32>
    %3 = vector.extract_strided_slice %1 {offsets = [6, 0], sizes = [6, 2], strides = [1, 1]} : vector<12x2xf32> to vector<6x2xf32>
    %4 = tpu.concatenate %2, %2, %3, %3 in 0 : vector<6x2xf32>, vector<6x2xf32>, vector<6x2xf32>, vector<6x2xf32> -> vector<24x2xf32>
    %c0_1 = arith.constant 0 : index
    %c0_2 = arith.constant 0 : index
    %5 = vector.load %arg1[%c0_1, %c0_2] : memref<24x2xf32, #tpu.memory_space<vmem>>, vector<24x2xf32>
    tpu.vector_store %arg1[%c0_1, %c0_2], %4 {strides = array<i32>} : memref<24x2xf32, #tpu.memory_space<vmem>>, vector<24x2xf32>,
    return
  }
}

</mosaic_0001>

<llo_original>
// kernel: model_forward.1
$region0: #{model_forward.1}
  #allocation0 [shape = 'u32[]', space=smem, size = 0x4, offset = 0x4, fixed_abs, tag = 'smem constant byte address 0x4 - core index']
  #allocation1 [shape = 'u32[144,128]{1,0:T(1,128)}', space=vmem, size = 0x12000, scoped, tag = 'internal scratch']
  %s0 = inlined_call_operand.vmem [shape: f32[12,2], index: 0, kind: input, shape index: {}]
  %s1 = inlined_call_operand.vmem [shape: f32[24,2], index: 1, kind: output, shape index: {}]
  %s2 = sld [smem:[#allocation0]]
  $region14: #{model_forward.1} parent=0
    _
  %s4 = ssub.s32 1, %s2
  %s5 = scalar_select 0, %s4, %s2
  // Predicated region
  $region2: #{model_forward.1} parent=0 // pred_check
    _
  $region3: #{model_forward.1} parent=0 // pred_check_branch
    %7 = sbr.rel (0) target = $region5
  $region4: #{model_forward.1} parent=0 // pred_region
    _
  $region5: #{model_forward.1} parent=0 // pred_fallthru
    _
  %v8 = vld [vmem:[%s0] sm:$0xff]
  %v9 = vld [vmem:[%s0 + $0x8] sm:$0xf]
  %v10 = vtanh.pop %v8
  %v11 = vtanh.pop %v9
  %v13 = vrot.slane %v10, 2
  %vm16 = vcmask 1045504
  %v17 = vrot.slane %v11, 2
  %v18 = vsel %vm16, %v13, %v17
  %vm21 = vcmask 1043456
  %v22 = vrot.slane %v10, 4
  %v23 = vrot.slane %v11, 4
  %v24 = vsel %vm21, %v22, %v23
  %v26 = vsel %vm16, %v10, %v13
  %v27 = vsel %vm21, %v13, %v18
  %vm28 = vcmask 1041408
  %v29 = vsel %vm28, %v17, %v24
  %vm30 = vcmask 15360
  %31 = vst.msk [vmem:[%s1] sm:$0xff] %vm30, %v26
  %32 = vst.msk [vmem:[%s1 + $0x8] sm:$0xff] %vm30, %v27
  %33 = vst.msk [vmem:[%s1 + $0x10] sm:$0xff] %vm30, %v29
  // Predicated region
  $region6: #{model_forward.1} parent=0 // pred_check
    _
  $region7: #{model_forward.1} parent=0 // pred_check_branch
    %35 = sbr.rel (0) target = $region9
  $region8: #{model_forward.1} parent=0 // pred_region
    _
  $region9: #{model_forward.1} parent=0 // pred_fallthru
    _
  // Predicated region
  $region10: #{model_forward.1} parent=0 // pred_check
    _
  $region11: #{model_forward.1} parent=0 // pred_check_branch
    %37 = sbr.rel (0) target = $region13
  $region12: #{model_forward.1} parent=0 // pred_region
    _
  $region13: #{model_forward.1} parent=0 // pred_fallthru
    _

</llo_original>
